<compile_context>
chip_gen: v7x
topology: tpu7x:2x2x1
jax: 0.10.0
libtpu: 0.0.40
codegen_flags: <defaults>
</compile_context>

<pallas_src>
import jax
import jax.numpy as jnp
from jax.experimental import pallas as pl
from jax.experimental.pallas import tpu as pltpu

_OUT = 3            # logits: entailment / neutral / contradiction
_OUT_PAD = 8        # small lane pad for the output block (== full array width)
_MAX_TILE_B = 512   # batch rows per grid step — chosen by the DMA/overhead
                    # amortization sweep (~85% of HBM roofline at ~512-row
                    # tiles), NOT by MXU M-occupancy.


def _cdiv(a: int, b: int) -> int:
    return -(-a // b)


def _round_up(x: int, m: int) -> int:
    return (x + m - 1) // m * m


def _sim_entail_kernel(s1_ref, s2_ref, wh1_ref, wh2_ref, wh3_ref, wh4_ref,
                       bh_ref, wo_ref, bo_ref, out_ref):
    # s1_ref, s2_ref        : (TB, E)       f32 or bf16 (streamed per grid step)
    # wh1..wh4_ref          : (E, H)        bf16 row-blocks of W_h^T (resident)
    # bh_ref                : (1, H)        f32  (resident)
    # wo_ref                : (H, OUT_PAD)  bf16 W_o^T zero-padded (resident)
    # bo_ref                : (1, OUT_PAD)  f32  (resident)
    # out_ref               : (TB, OUT_PAD) f32  output block
    s1 = s1_ref[...].astype(jnp.float32)
    s2 = s2_ref[...].astype(jnp.float32)
    mult = s1 * s2                 # f32 VPU
    absd = jnp.abs(s1 - s2)        # f32 VPU

    mxu = wh1_ref.dtype            # bf16 MXU operands, f32 accumulation
    h = jnp.dot(s1.astype(mxu), wh1_ref[...], preferred_element_type=jnp.float32)
    h = h + jnp.dot(s2.astype(mxu), wh2_ref[...], preferred_element_type=jnp.float32)
    h = h + jnp.dot(mult.astype(mxu), wh3_ref[...], preferred_element_type=jnp.float32)
    h = h + jnp.dot(absd.astype(mxu), wh4_ref[...], preferred_element_type=jnp.float32)
    h = jnp.tanh(h + bh_ref[...])  # f32, EUP slot

    out_ref[...] = (
        jnp.dot(h.astype(wo_ref.dtype), wo_ref[...],
                preferred_element_type=jnp.float32)
        + bo_ref[...]
    )


def prepare_params(params):
    """One-time conversion to kernel layout (hoisted out of the call path):
    W_h^T split into four (E, H) bf16 blocks, W_o^T/b_o padded to 8 lanes."""
    wh, bh, wo, bo = params["wh"], params["bh"], params["wo"], params["bo"]
    H, four_e = wh.shape
    E = four_e // 4
    wh_t = wh.T.astype(jnp.bfloat16)                                  # (4E, H)
    kp = {
        "wh1": wh_t[0 * E:1 * E, :],
        "wh2": wh_t[1 * E:2 * E, :],
        "wh3": wh_t[2 * E:3 * E, :],
        "wh4": wh_t[3 * E:4 * E, :],
        "bh": bh.reshape(1, -1).astype(jnp.float32),                  # (1, H)
    }
    wo_t = jnp.zeros((H, _OUT_PAD), jnp.bfloat16)
    kp["wo_t"] = wo_t.at[:, :_OUT].set(wo.T.astype(jnp.bfloat16))     # (H, 8)
    bo2 = jnp.zeros((1, _OUT_PAD), jnp.float32)
    kp["bo"] = bo2.at[:, :_OUT].set(bo.astype(jnp.float32))           # (1, 8)
    return kp


@jax.jit
def similarity_entailment(sent1vec, sent2vec, kparams):
    """sent1vec, sent2vec: (E,) or (B, E) float32/bfloat16.  Returns (3,) or (B, 3)."""
    squeeze = sent1vec.ndim == 1
    # bf16 inputs stream as bf16 (half the read bytes); anything else as f32.
    in_dtype = jnp.bfloat16 if sent1vec.dtype == jnp.bfloat16 else jnp.float32
    s1 = jnp.atleast_2d(sent1vec).astype(in_dtype)
    s2 = jnp.atleast_2d(sent2vec).astype(in_dtype)
    B, E = s1.shape
    H = kparams["wh1"].shape[1]

    # Balanced tiling: big tiles for grid-overhead/DMA amortization, >= 2 grid
    # steps (when B allows) for v7x dual-TC sharding, minimal padding waste.
    n_tiles = max(1, _cdiv(B, _MAX_TILE_B))
    if B > 8:
        n_tiles = max(n_tiles, 2)
    tile_b = _round_up(_cdiv(B, n_tiles), 8)
    b_pad = _round_up(B, tile_b)
    if b_pad != B:
        pad = ((0, b_pad - B), (0, 0))
        s1 = jnp.pad(s1, pad)
        s2 = jnp.pad(s2, pad)

    # VMEM budget: double-buffered s1/s2/out streams + resident weights
    # (conservatively counted double-buffered), with 2x headroom; clamp at
    # 48 MiB so it stays safe on v7x's 64 MiB physical VMEM.
    in_bytes = jnp.dtype(in_dtype).itemsize
    w_bytes = (4 * E * H + H * _OUT_PAD) * 2 + (H + _OUT_PAD) * 4
    stream_bytes = 2 * (2 * tile_b * E * in_bytes) + 2 * tile_b * _OUT_PAD * 4
    vmem_limit = int(min(max(2 * (2 * w_bytes + stream_bytes), 32 << 20), 48 << 20))

    out = pl.pallas_call(
        _sim_entail_kernel,
        out_shape=jax.ShapeDtypeStruct((b_pad, _OUT_PAD), jnp.float32),
        grid_spec=pltpu.PrefetchScalarGridSpec(
            num_scalar_prefetch=0,
            grid=(b_pad // tile_b,),
            in_specs=[
                pl.BlockSpec((tile_b, E), lambda i: (i, 0)),       # s1 (streamed)
                pl.BlockSpec((tile_b, E), lambda i: (i, 0)),       # s2 (streamed)
                pl.BlockSpec((E, H), lambda i: (0, 0)),            # W_h^T[0:E]   (resident)
                pl.BlockSpec((E, H), lambda i: (0, 0)),            # W_h^T[E:2E]  (resident)
                pl.BlockSpec((E, H), lambda i: (0, 0)),            # W_h^T[2E:3E] (resident)
                pl.BlockSpec((E, H), lambda i: (0, 0)),            # W_h^T[3E:4E] (resident)
                pl.BlockSpec((1, H), lambda i: (0, 0)),            # b_h   (resident)
                pl.BlockSpec((H, _OUT_PAD), lambda i: (0, 0)),     # W_o^T (resident)
                pl.BlockSpec((1, _OUT_PAD), lambda i: (0, 0)),     # b_o   (resident)
            ],
            out_specs=pl.BlockSpec((tile_b, _OUT_PAD), lambda i: (i, 0)),
        ),
        compiler_params=pltpu.CompilerParams(
            dimension_semantics=("parallel",),
            vmem_limit_bytes=vmem_limit),
    )(s1, s2,
      kparams["wh1"], kparams["wh2"], kparams["wh3"], kparams["wh4"],
      kparams["bh"], kparams["wo_t"], kparams["bo"])

    out = out[:B, :_OUT]
    return out[0] if squeeze else out


def init_params(key, embed_size, hidden_size):
    """Deterministic init mimicking torch.nn.Linear (uniform +-1/sqrt(fan_in))."""
    k1, k2, k3, k4 = jax.random.split(key, 4)
    lim_h = 1.0 / jnp.sqrt(4.0 * embed_size)
    lim_o = 1.0 / jnp.sqrt(1.0 * hidden_size)
    return {
        "wh": jax.random.uniform(k1, (hidden_size, 4 * embed_size),
                                 jnp.float32, -lim_h, lim_h),
        "bh": jax.random.uniform(k2, (hidden_size,), jnp.float32, -lim_h, lim_h),
        "wo": jax.random.uniform(k3, (3, hidden_size), jnp.float32, -lim_o, lim_o),
        "bo": jax.random.uniform(k4, (3,), jnp.float32, -lim_o, lim_o),
    }


def _reference_f32(s1, s2, params):
    """Pure-f32 reference (exact PyTorch math)."""
    mult = s1 * s2
    absd = jnp.abs(s1 - s2)
    vd = jnp.concatenate([s1, s2, mult, absd], axis=-1)
    h = jnp.tanh(vd @ params["wh"].T + params["bh"])
    return h @ params["wo"].T + params["bo"]


def _reference_bf16(s1, s2, kparams):
    """Reference that emulates the kernel's bf16 MXU operands / f32 accumulation."""
    mult = s1 * s2
    absd = jnp.abs(s1 - s2)
    vd = jnp.concatenate([s1, s2, mult, absd], axis=-1)
    vd = vd.astype(jnp.bfloat16).astype(jnp.float32)
    wh = jnp.concatenate([kparams["wh1"], kparams["wh2"],
                          kparams["wh3"], kparams["wh4"]], axis=0).astype(jnp.float32)
    h = jnp.tanh(vd @ wh + kparams["bh"])
    h = h.astype(jnp.bfloat16).astype(jnp.float32)
    out = h @ kparams["wo_t"].astype(jnp.float32) + kparams["bo"]
    return out[:, :_OUT]


if __name__ == "__main__":
    embed_size, hidden_size, batch = 64, 32, 16
    key = jax.random.PRNGKey(0)
    kp, k1, k2, k3, k4 = jax.random.split(key, 5)
    params = init_params(kp, embed_size, hidden_size)
    kparams = prepare_params(params)   # hoisted: split/transpose/pad happen once

    sent1vec = jax.random.normal(k1, (batch, embed_size), jnp.float32)
    sent2vec = jax.random.normal(k2, (batch, embed_size), jnp.float32)

    # Batched forward (B=16 -> 2 grid steps of 8 rows: exercises the multi-step grid).
    out = jax.block_until_ready(similarity_entailment(sent1vec, sent2vec, kparams))
    assert out.shape == (batch, _OUT)

    # Tight check vs a reference using the same bf16-rounded MXU operands.
    ref_b = _reference_bf16(sent1vec, sent2vec, kparams)
    assert jnp.allclose(out, ref_b, atol=1e-3, rtol=1e-3), "bf16-emulated ref mismatch"

    # Sanity check vs the exact f32 PyTorch math (bf16 operand rounding only).
    ref_f = _reference_f32(sent1vec, sent2vec, params)
    assert jnp.allclose(out, ref_f, atol=1e-1, rtol=1e-1), "f32 ref mismatch"

    # Non-multiple batch exercises balanced tiling and zero-row padding.
    b2 = 37
    s1b = jax.random.normal(k3, (b2, embed_size), jnp.float32)
    s2b = jax.random.normal(k4, (b2, embed_size), jnp.float32)
    out2 = jax.block_until_ready(similarity_entailment(s1b, s2b, kparams))
    assert out2.shape == (b2, _OUT)
    assert jnp.allclose(out2, _reference_bf16(s1b, s2b, kparams),
                        atol=1e-3, rtol=1e-3), "padded-batch mismatch"

    # Unbatched path matches the original module's (E,) -> (3,) contract.
    out1 = jax.block_until_ready(
        similarity_entailment(sent1vec[0], sent2vec[0], kparams))
    assert out1.shape == (_OUT,)
    assert jnp.allclose(out1, out[0], atol=1e-5, rtol=1e-5)

    print("KERNEL_OK")
</pallas_src>

<mosaic_0001>
module attributes {stable_mosaic.version = 11 : i64} {
  func.func @_sim_entail_kernel(%arg0: i32, %arg1: memref<8x64xf32, #tpu.memory_space<vmem>>, %arg2: memref<8x64xf32, #tpu.memory_space<vmem>>, %arg3: memref<64x32xbf16, #tpu.memory_space<vmem>>, %arg4: memref<64x32xbf16, #tpu.memory_space<vmem>>, %arg5: memref<64x32xbf16, #tpu.memory_space<vmem>>, %arg6: memref<64x32xbf16, #tpu.memory_space<vmem>>, %arg7: memref<1x32xf32, #tpu.memory_space<vmem>>, %arg8: memref<32x8xbf16, #tpu.memory_space<vmem>>, %arg9: memref<1x8xf32, #tpu.memory_space<vmem>>, %arg10: memref<8x8xf32, #tpu.memory_space<vmem>>) attributes {dimension_semantics = [#tpu.dimension_semantics<parallel>], iteration_bounds = array<i64: 2>, scalar_prefetch = 0 : i64, scratch_operands = 0 : i64, tpu.core_type = #tpu.core_type<tc>, window_params = [{transform_indices = @transform_0, window_bounds = array<i64: 8, 64>}, {transform_indices = @transform_1, window_bounds = array<i64: 8, 64>}, {pipeline_mode = #tpu.pipeline_mode<synchronous>, transform_indices = @transform_2, window_bounds = array<i64: 64, 32>}, {pipeline_mode = #tpu.pipeline_mode<synchronous>, transform_indices = @transform_3, window_bounds = array<i64: 64, 32>}, {pipeline_mode = #tpu.pipeline_mode<synchronous>, transform_indices = @transform_4, window_bounds = array<i64: 64, 32>}, {pipeline_mode = #tpu.pipeline_mode<synchronous>, transform_indices = @transform_5, window_bounds = array<i64: 64, 32>}, {pipeline_mode = #tpu.pipeline_mode<synchronous>, transform_indices = @transform_6, window_bounds = array<i64: 1, 32>}, {pipeline_mode = #tpu.pipeline_mode<synchronous>, transform_indices = @transform_7, window_bounds = array<i64: 32, 8>}, {pipeline_mode = #tpu.pipeline_mode<synchronous>, transform_indices = @transform_8, window_bounds = array<i64: 1, 8>}, {transform_indices = @transform_9, window_bounds = array<i64: 8, 8>}]} {
    %c0 = arith.constant 0 : index
    %c0_0 = arith.constant 0 : index
    %0 = vector.load %arg1[%c0, %c0_0] : memref<8x64xf32, #tpu.memory_space<vmem>>, vector<8x64xf32>
    %c0_1 = arith.constant 0 : index
    %c0_2 = arith.constant 0 : index
    %1 = vector.load %arg2[%c0_1, %c0_2] : memref<8x64xf32, #tpu.memory_space<vmem>>, vector<8x64xf32>
    %2 = arith.mulf %0, %1 : vector<8x64xf32>
    %3 = arith.subf %0, %1 : vector<8x64xf32>
    %4 = math.absf %3 : vector<8x64xf32>
    %5 = arith.truncf %0 : vector<8x64xf32> to vector<8x64xbf16>
    %c0_3 = arith.constant 0 : index
    %c0_4 = arith.constant 0 : index
    %6 = vector.load %arg3[%c0_3, %c0_4] : memref<64x32xbf16, #tpu.memory_space<vmem>>, vector<64x32xbf16>
    %cst = arith.constant dense<0.000000e+00> : vector<8x32xf32>
    %7 = tpu.matmul %5, %6, %cst {dimension_numbers = #tpu.dot_dimension_numbers<[1], [0], [0], [1], [0, 0, 1, 1], [], []>} : vector<8x64xbf16>, vector<64x32xbf16>, vector<8x32xf32> -> vector<8x32xf32>
    %8 = arith.truncf %1 : vector<8x64xf32> to vector<8x64xbf16>
    %c0_5 = arith.constant 0 : index
    %c0_6 = arith.constant 0 : index
    %9 = vector.load %arg4[%c0_5, %c0_6] : memref<64x32xbf16, #tpu.memory_space<vmem>>, vector<64x32xbf16>
    %cst_7 = arith.constant dense<0.000000e+00> : vector<8x32xf32>
    %10 = tpu.matmul %8, %9, %cst_7 {dimension_numbers = #tpu.dot_dimension_numbers<[1], [0], [0], [1], [0, 0, 1, 1], [], []>} : vector<8x64xbf16>, vector<64x32xbf16>, vector<8x32xf32> -> vector<8x32xf32>
    %11 = arith.addf %7, %10 : vector<8x32xf32>
    %12 = arith.truncf %2 : vector<8x64xf32> to vector<8x64xbf16>
    %c0_8 = arith.constant 0 : index
    %c0_9 = arith.constant 0 : index
    %13 = vector.load %arg5[%c0_8, %c0_9] : memref<64x32xbf16, #tpu.memory_space<vmem>>, vector<64x32xbf16>
    %cst_10 = arith.constant dense<0.000000e+00> : vector<8x32xf32>
    %14 = tpu.matmul %12, %13, %cst_10 {dimension_numbers = #tpu.dot_dimension_numbers<[1], [0], [0], [1], [0, 0, 1, 1], [], []>} : vector<8x64xbf16>, vector<64x32xbf16>, vector<8x32xf32> -> vector<8x32xf32>
    %15 = arith.addf %11, %14 : vector<8x32xf32>
    %16 = arith.truncf %4 : vector<8x64xf32> to vector<8x64xbf16>
    %c0_11 = arith.constant 0 : index
    %c0_12 = arith.constant 0 : index
    %17 = vector.load %arg6[%c0_11, %c0_12] : memref<64x32xbf16, #tpu.memory_space<vmem>>, vector<64x32xbf16>
    %cst_13 = arith.constant dense<0.000000e+00> : vector<8x32xf32>
    %18 = tpu.matmul %16, %17, %cst_13 {dimension_numbers = #tpu.dot_dimension_numbers<[1], [0], [0], [1], [0, 0, 1, 1], [], []>} : vector<8x64xbf16>, vector<64x32xbf16>, vector<8x32xf32> -> vector<8x32xf32>
    %19 = arith.addf %15, %18 : vector<8x32xf32>
    %c0_14 = arith.constant 0 : index
    %c0_15 = arith.constant 0 : index
    %20 = vector.load %arg7[%c0_14, %c0_15] : memref<1x32xf32, #tpu.memory_space<vmem>>, vector<1x32xf32>
    %21 = vector.broadcast %20 : vector<1x32xf32> to vector<8x32xf32>
    %22 = arith.addf %19, %21 : vector<8x32xf32>
    %23 = math.tanh %22 : vector<8x32xf32>
    %24 = arith.truncf %23 : vector<8x32xf32> to vector<8x32xbf16>
    %c0_16 = arith.constant 0 : index
    %c0_17 = arith.constant 0 : index
    %25 = vector.load %arg8[%c0_16, %c0_17] : memref<32x8xbf16, #tpu.memory_space<vmem>>, vector<32x8xbf16>
    %cst_18 = arith.constant dense<0.000000e+00> : vector<8x8xf32>
    %26 = tpu.matmul %24, %25, %cst_18 {dimension_numbers = #tpu.dot_dimension_numbers<[1], [0], [0], [1], [0, 0, 1, 1], [], []>} : vector<8x32xbf16>, vector<32x8xbf16>, vector<8x8xf32> -> vector<8x8xf32>
    %c0_19 = arith.constant 0 : index
    %c0_20 = arith.constant 0 : index
    %27 = vector.load %arg9[%c0_19, %c0_20] : memref<1x8xf32, #tpu.memory_space<vmem>>, vector<1x8xf32>
    %28 = vector.broadcast %27 : vector<1x8xf32> to vector<8x8xf32>
    %29 = arith.addf %26, %28 : vector<8x8xf32>
    %c0_21 = arith.constant 0 : index
    %c0_22 = arith.constant 0 : index
    %30 = vector.load %arg10[%c0_21, %c0_22] : memref<8x8xf32, #tpu.memory_space<vmem>>, vector<8x8xf32>
    tpu.vector_store %arg10[%c0_21, %c0_22], %29 {strides = array<i32>} : memref<8x8xf32, #tpu.memory_space<vmem>>, vector<8x8xf32>,
    return
  }
  func.func @transform_0(%arg0: i32) -> (i32, i32) {
    %c0_i32 = arith.constant 0 : i32
    %c0_i32_0 = arith.constant 0 : i32
    return %arg0, %c0_i32 : i32, i32
  }
  func.func @transform_1(%arg0: i32) -> (i32, i32) {
    %c0_i32 = arith.constant 0 : i32
    %c0_i32_0 = arith.constant 0 : i32
    return %arg0, %c0_i32 : i32, i32
  }
  func.func @transform_2(%arg0: i32) -> (i32, i32) {
    %c0_i32 = arith.constant 0 : i32
    %c0_i32_0 = arith.constant 0 : i32
    %c0_i32_1 = arith.constant 0 : i32
    return %c0_i32, %c0_i32_0 : i32, i32
  }
  func.func @transform_3(%arg0: i32) -> (i32, i32) {
    %c0_i32 = arith.constant 0 : i32
    %c0_i32_0 = arith.constant 0 : i32
    %c0_i32_1 = arith.constant 0 : i32
    return %c0_i32, %c0_i32_0 : i32, i32
  }
  func.func @transform_4(%arg0: i32) -> (i32, i32) {
    %c0_i32 = arith.constant 0 : i32
    %c0_i32_0 = arith.constant 0 : i32
    %c0_i32_1 = arith.constant 0 : i32
    return %c0_i32, %c0_i32_0 : i32, i32
  }
  func.func @transform_5(%arg0: i32) -> (i32, i32) {
    %c0_i32 = arith.constant 0 : i32
    %c0_i32_0 = arith.constant 0 : i32
    %c0_i32_1 = arith.constant 0 : i32
    return %c0_i32, %c0_i32_0 : i32, i32
  }
  func.func @transform_6(%arg0: i32) -> (i32, i32) {
    %c0_i32 = arith.constant 0 : i32
    %c0_i32_0 = arith.constant 0 : i32
    %c0_i32_1 = arith.constant 0 : i32
    return %c0_i32, %c0_i32_0 : i32, i32
  }
  func.func @transform_7(%arg0: i32) -> (i32, i32) {
    %c0_i32 = arith.constant 0 : i32
    %c0_i32_0 = arith.constant 0 : i32
    %c0_i32_1 = arith.constant 0 : i32
    return %c0_i32, %c0_i32_0 : i32, i32
  }
  func.func @transform_8(%arg0: i32) -> (i32, i32) {
    %c0_i32 = arith.constant 0 : i32
    %c0_i32_0 = arith.constant 0 : i32
    %c0_i32_1 = arith.constant 0 : i32
    return %c0_i32, %c0_i32_0 : i32, i32
  }
  func.func @transform_9(%arg0: i32) -> (i32, i32) {
    %c0_i32 = arith.constant 0 : i32
    %c0_i32_0 = arith.constant 0 : i32
    return %arg0, %c0_i32 : i32, i32
  }
}

</mosaic_0001>

<llo_original>
// kernel: similarity_entailment.1
$region0: #{similarity_entailment.1}
  #allocation0 [shape = 'u32[]', space=smem, size = 0x4, offset = 0x4, fixed_abs, tag = 'smem constant byte address 0x4 - core index']
  #allocation1 [shape = 'u32[144,128]{1,0:T(1,128)}', space=vmem, size = 0x12000, scoped, tag = 'internal scratch']
  %s0 = inlined_call_operand.vmem [shape: f32[16,64], index: 0, kind: input, shape index: {}]
  %s1 = inlined_call_operand.vmem [shape: f32[16,64], index: 1, kind: input, shape index: {}]
  %s2 = inlined_call_operand.vmem [shape: bf16[64,32], index: 2, kind: input, shape index: {}]
  %s3 = inlined_call_operand.vmem [shape: bf16[64,32], index: 3, kind: input, shape index: {}]
  %s4 = inlined_call_operand.vmem [shape: bf16[64,32], index: 4, kind: input, shape index: {}]
  %s5 = inlined_call_operand.vmem [shape: bf16[64,32], index: 5, kind: input, shape index: {}]
  %s6 = inlined_call_operand.vmem [shape: f32[1,32], index: 6, kind: input, shape index: {}]
  %s7 = inlined_call_operand.vmem [shape: bf16[32,8], index: 7, kind: input, shape index: {}]
  %s8 = inlined_call_operand.vmem [shape: f32[1,8], index: 8, kind: input, shape index: {}]
  %s9 = inlined_call_operand.vmem [shape: f32[16,8], index: 9, kind: output, shape index: {}]
  %s10 = sld [smem:[#allocation0]]
  $region69: #{similarity_entailment.1} parent=0
    _
  %s12 = ssub.s32 1, %s10
  %s13 = scalar_select 0, %s12, %s10
  loop: start=0, step=1, limit=4
  $region2: #{similarity_entailment.1} parent=0 // loop_pre_header
    _
  $region3: #{similarity_entailment.1} parent=0 // loop_header
    %s15 = sphi 0, %s19
    %p16 = scmp.ge.s32.totalorder %s15, 4
    %s25 = sphi 0, %s27
    %s28 = sphi 0, %s25
    %s29 = sphi 0, %s28
    %s45 = sphi 0, %s29
    %s51 = sphi 0, %s53
    %s54 = sphi 0, %s51
    %s55 = sphi 0, %s54
    %s71 = sphi 0, %s55
    %s75 = sphi 0, %s75
    %s77 = sphi 0, %s75
    %s78 = sphi 0, %s77
    %s92 = sphi 0, %s78
    %s96 = sphi 0, %s96
    %s98 = sphi 0, %s96
    %s99 = sphi 0, %s98
    %s113 = sphi 0, %s99
    %s117 = sphi 0, %s117
    %s119 = sphi 0, %s117
    %s120 = sphi 0, %s119
    %s134 = sphi 0, %s120
    %s138 = sphi 0, %s138
    %s140 = sphi 0, %s138
    %s141 = sphi 0, %s140
    %s155 = sphi 0, %s141
    %s159 = sphi 0, %s159
    %s161 = sphi 0, %s159
    %s162 = sphi 0, %s161
    %s176 = sphi 0, %s162
    %s180 = sphi 0, %s180
    %s182 = sphi 0, %s180
    %s183 = sphi 0, %s182
    %s197 = sphi 0, %s183
    %s201 = sphi 0, %s201
    %s203 = sphi 0, %s201
    %s204 = sphi 0, %s203
    %s218 = sphi 0, %s204
    %s224 = sphi 0, %s226
    %s227 = sphi 0, %s224
    %s228 = sphi 0, %s227
    %s244 = sphi 0, %s228
  $region4: #{similarity_entailment.1} parent=0 // loop_header_branch
    %18 = sbr.rel (%p16) target = $region8
  $region5: #{similarity_entailment.1} parent=0 // loop_body
    %s20 = ssub.s32 %s15, 1
    %s21 = ssub.s32 %s15, 2
    %s22 = sadd.s32 %s15, 1
    %s23 = ssub.s32 %s15, %s22
    %p24 = scmp.eq.s32.totalorder %s23, 0
    %s26 = sadd.s32 %s25, 1
    %s27 = scalar_select %p24, %s25, %s26
    %p30 = pneg %p24
    %p31 = scmp.eq.s32.totalorder %s15, 1
    %p32 = por %p30, %p31
    %p33 = scmp.ne.s32.totalorder %s25, %s28
    %p34 = scmp.eq.s32.totalorder %s15, 0
    %p35 = por %p33, %p34
    %p36 = scmp.ne.s32.totalorder %s25, %s28
    %p37 = scmp.eq.s32.totalorder %s20, 1
    %p38 = por %p36, %p37
    %p39 = scmp.ne.s32.totalorder %s28, %s29
    %p40 = scmp.eq.s32.totalorder %s20, 0
    %p41 = por %p39, %p40
    %p42 = scmp.ne.s32.totalorder %s28, %s29
    %p43 = scmp.eq.s32.totalorder %s21, 1
    %p44 = por %p42, %p43
    %p46 = scmp.ne.s32.totalorder %s29, %s45
    %p47 = scmp.eq.s32.totalorder %s21, 0
    %p48 = por %p46, %p47
    %s49 = ssub.s32 %s15, %s22
    %p50 = scmp.eq.s32.totalorder %s49, 0
    %s52 = sadd.s32 %s51, 1
    %s53 = scalar_select %p50, %s51, %s52
    %p56 = pneg %p50
    %p57 = scmp.eq.s32.totalorder %s15, 1
    %p58 = por %p56, %p57
    %p59 = scmp.ne.s32.totalorder %s51, %s54
    %p60 = scmp.eq.s32.totalorder %s15, 0
    %p61 = por %p59, %p60
    %p62 = scmp.ne.s32.totalorder %s51, %s54
    %p63 = scmp.eq.s32.totalorder %s20, 1
    %p64 = por %p62, %p63
    %p65 = scmp.ne.s32.totalorder %s54, %s55
    %p66 = scmp.eq.s32.totalorder %s20, 0
    %p67 = por %p65, %p66
    %p68 = scmp.ne.s32.totalorder %s54, %s55
    %p69 = scmp.eq.s32.totalorder %s21, 1
    %p70 = por %p68, %p69
    %p72 = scmp.ne.s32.totalorder %s55, %s71
    %p73 = scmp.eq.s32.totalorder %s21, 0
    %p74 = por %p72, %p73
    %s76 = sadd.s32 %s75, 1
    %p79 = scmp.eq.s32.totalorder %s15, 1
    %p80 = scmp.ne.s32.totalorder %s75, %s77
    %p81 = scmp.eq.s32.totalorder %s15, 0
    %p82 = por %p80, %p81
    %p83 = scmp.ne.s32.totalorder %s75, %s77
    %p84 = scmp.eq.s32.totalorder %s20, 1
    %p85 = por %p83, %p84
    %p86 = scmp.ne.s32.totalorder %s77, %s78
    %p87 = scmp.eq.s32.totalorder %s20, 0
    %p88 = por %p86, %p87
    %p89 = scmp.ne.s32.totalorder %s77, %s78
    %p90 = scmp.eq.s32.totalorder %s21, 1
    %p91 = por %p89, %p90
    %p93 = scmp.ne.s32.totalorder %s78, %s92
    %p94 = scmp.eq.s32.totalorder %s21, 0
    %p95 = por %p93, %p94
    %s97 = sadd.s32 %s96, 1
    %p100 = scmp.eq.s32.totalorder %s15, 1
    %p101 = scmp.ne.s32.totalorder %s96, %s98
    %p102 = scmp.eq.s32.totalorder %s15, 0
    %p103 = por %p101, %p102
    %p104 = scmp.ne.s32.totalorder %s96, %s98
    %p105 = scmp.eq.s32.totalorder %s20, 1
    %p106 = por %p104, %p105
    %p107 = scmp.ne.s32.totalorder %s98, %s99
    %p108 = scmp.eq.s32.totalorder %s20, 0
    %p109 = por %p107, %p108
    %p110 = scmp.ne.s32.totalorder %s98, %s99
    %p111 = scmp.eq.s32.totalorder %s21, 1
    %p112 = por %p110, %p111
    %p114 = scmp.ne.s32.totalorder %s99, %s113
    %p115 = scmp.eq.s32.totalorder %s21, 0
    %p116 = por %p114, %p115
    %s118 = sadd.s32 %s117, 1
    %p121 = scmp.eq.s32.totalorder %s15, 1
    %p122 = scmp.ne.s32.totalorder %s117, %s119
    %p123 = scmp.eq.s32.totalorder %s15, 0
    %p124 = por %p122, %p123
    %p125 = scmp.ne.s32.totalorder %s117, %s119
    %p126 = scmp.eq.s32.totalorder %s20, 1
    %p127 = por %p125, %p126
    %p128 = scmp.ne.s32.totalorder %s119, %s120
    %p129 = scmp.eq.s32.totalorder %s20, 0
    %p130 = por %p128, %p129
    %p131 = scmp.ne.s32.totalorder %s119, %s120
    %p132 = scmp.eq.s32.totalorder %s21, 1
    %p133 = por %p131, %p132
    %p135 = scmp.ne.s32.totalorder %s120, %s134
    %p136 = scmp.eq.s32.totalorder %s21, 0
    %p137 = por %p135, %p136
    %s139 = sadd.s32 %s138, 1
    %p142 = scmp.eq.s32.totalorder %s15, 1
    %p143 = scmp.ne.s32.totalorder %s138, %s140
    %p144 = scmp.eq.s32.totalorder %s15, 0
    %p145 = por %p143, %p144
    %p146 = scmp.ne.s32.totalorder %s138, %s140
    %p147 = scmp.eq.s32.totalorder %s20, 1
    %p148 = por %p146, %p147
    %p149 = scmp.ne.s32.totalorder %s140, %s141
    %p150 = scmp.eq.s32.totalorder %s20, 0
    %p151 = por %p149, %p150
    %p152 = scmp.ne.s32.totalorder %s140, %s141
    %p153 = scmp.eq.s32.totalorder %s21, 1
    %p154 = por %p152, %p153
    %p156 = scmp.ne.s32.totalorder %s141, %s155
    %p157 = scmp.eq.s32.totalorder %s21, 0
    %p158 = por %p156, %p157
    %s160 = sadd.s32 %s159, 1
    %p163 = scmp.eq.s32.totalorder %s15, 1
    %p164 = scmp.ne.s32.totalorder %s159, %s161
    %p165 = scmp.eq.s32.totalorder %s15, 0
    %p166 = por %p164, %p165
    %p167 = scmp.ne.s32.totalorder %s159, %s161
    %p168 = scmp.eq.s32.totalorder %s20, 1
    %p169 = por %p167, %p168
    %p170 = scmp.ne.s32.totalorder %s161, %s162
    %p171 = scmp.eq.s32.totalorder %s20, 0
    %p172 = por %p170, %p171
    %p173 = scmp.ne.s32.totalorder %s161, %s162
    %p174 = scmp.eq.s32.totalorder %s21, 1
    %p175 = por %p173, %p174
    %p177 = scmp.ne.s32.totalorder %s162, %s176
    %p178 = scmp.eq.s32.totalorder %s21, 0
    %p179 = por %p177, %p178
    %s181 = sadd.s32 %s180, 1
    %p184 = scmp.eq.s32.totalorder %s15, 1
    %p185 = scmp.ne.s32.totalorder %s180, %s182
    %p186 = scmp.eq.s32.totalorder %s15, 0
    %p187 = por %p185, %p186
    %p188 = scmp.ne.s32.totalorder %s180, %s182
    %p189 = scmp.eq.s32.totalorder %s20, 1
    %p190 = por %p188, %p189
    %p191 = scmp.ne.s32.totalorder %s182, %s183
    %p192 = scmp.eq.s32.totalorder %s20, 0
    %p193 = por %p191, %p192
    %p194 = scmp.ne.s32.totalorder %s182, %s183
    %p195 = scmp.eq.s32.totalorder %s21, 1
    %p196 = por %p194, %p195
    %p198 = scmp.ne.s32.totalorder %s183, %s197
    %p199 = scmp.eq.s32.totalorder %s21, 0
    %p200 = por %p198, %p199
    %s202 = sadd.s32 %s201, 1
    %p205 = scmp.eq.s32.totalorder %s15, 1
    %p206 = scmp.ne.s32.totalorder %s201, %s203
    %p207 = scmp.eq.s32.totalorder %s15, 0
    %p208 = por %p206, %p207
    %p209 = scmp.ne.s32.totalorder %s201, %s203
    %p210 = scmp.eq.s32.totalorder %s20, 1
    %p211 = por %p209, %p210
    %p212 = scmp.ne.s32.totalorder %s203, %s204
    %p213 = scmp.eq.s32.totalorder %s20, 0
    %p214 = por %p212, %p213
    %p215 = scmp.ne.s32.totalorder %s203, %s204
    %p216 = scmp.eq.s32.totalorder %s21, 1
    %p217 = por %p215, %p216
    %p219 = scmp.ne.s32.totalorder %s204, %s218
    %p220 = scmp.eq.s32.totalorder %s21, 0
    %p221 = por %p219, %p220
    %s222 = ssub.s32 %s15, %s22
    %p223 = scmp.eq.s32.totalorder %s222, 0
    %s225 = sadd.s32 %s224, 1
    %s226 = scalar_select %p223, %s224, %s225
    %p229 = pneg %p223
    %p230 = scmp.eq.s32.totalorder %s15, 1
    %p231 = por %p229, %p230
    %p232 = scmp.ne.s32.totalorder %s224, %s227
    %p233 = scmp.eq.s32.totalorder %s15, 0
    %p234 = por %p232, %p233
    %p235 = scmp.ne.s32.totalorder %s224, %s227
    %p236 = scmp.eq.s32.totalorder %s20, 1
    %p237 = por %p235, %p236
    %p238 = scmp.ne.s32.totalorder %s227, %s228
    %p239 = scmp.eq.s32.totalorder %s20, 0
    %p240 = por %p238, %p239
    %p241 = scmp.ne.s32.totalorder %s227, %s228
    %p242 = scmp.eq.s32.totalorder %s21, 1
    %p243 = por %p241, %p242
    %p245 = scmp.ne.s32.totalorder %s228, %s244
    %p246 = scmp.eq.s32.totalorder %s21, 0
    %p247 = por %p245, %p246
    %p248 = scmp.le.s32.totalorder 1, %s15
    %p249 = scmp.lt.s32.totalorder %s15, 3
    %p250 = pnand %p248, %p249
    %p251 = pneg %p250
    // Predicated region
    $region9: #{similarity_entailment.1} parent=5 // pred_check
      _
    $region10: #{similarity_entailment.1} parent=5 // pred_check_branch
      %253 = sbr.rel (%p250) target = $region12
    $region11: #{similarity_entailment.1} parent=5 // pred_region
      %s254 = ssub.s32 %s15, 1
      // Predicated region
      $region13: #{similarity_entailment.1} parent=11 // pred_check
        %p255 = pneg %p88
      $region14: #{similarity_entailment.1} parent=11 // pred_check_branch
        %257 = sbr.rel (%p255) target = $region16
      $region15: #{similarity_entailment.1} parent=11 // pred_region
        _
      $region16: #{similarity_entailment.1} parent=11 // pred_fallthru
        _
      // Predicated region
      $region17: #{similarity_entailment.1} parent=11 // pred_check
        %p258 = pneg %p109
      $region18: #{similarity_entailment.1} parent=11 // pred_check_branch
        %260 = sbr.rel (%p258) target = $region20
      $region19: #{similarity_entailment.1} parent=11 // pred_region
        _
      $region20: #{similarity_entailment.1} parent=11 // pred_fallthru
        _
      // Predicated region
      $region21: #{similarity_entailment.1} parent=11 // pred_check
        %p261 = pneg %p130
      $region22: #{similarity_entailment.1} parent=11 // pred_check_branch
        %263 = sbr.rel (%p261) target = $region24
      $region23: #{similarity_entailment.1} parent=11 // pred_region
        _
      $region24: #{similarity_entailment.1} parent=11 // pred_fallthru
        _
      // Predicated region
      $region25: #{similarity_entailment.1} parent=11 // pred_check
        %p264 = pneg %p151
      $region26: #{similarity_entailment.1} parent=11 // pred_check_branch
        %266 = sbr.rel (%p264) target = $region28
      $region27: #{similarity_entailment.1} parent=11 // pred_region
        _
      $region28: #{similarity_entailment.1} parent=11 // pred_fallthru
        _
      // Predicated region
      $region29: #{similarity_entailment.1} parent=11 // pred_check
        %p267 = pneg %p172
      $region30: #{similarity_entailment.1} parent=11 // pred_check_branch
        %269 = sbr.rel (%p267) target = $region32
      $region31: #{similarity_entailment.1} parent=11 // pred_region
        _
      $region32: #{similarity_entailment.1} parent=11 // pred_fallthru
        _
      // Predicated region
      $region33: #{similarity_entailment.1} parent=11 // pred_check
        %p270 = pneg %p193
      $region34: #{similarity_entailment.1} parent=11 // pred_check_branch
        %272 = sbr.rel (%p270) target = $region36
      $region35: #{similarity_entailment.1} parent=11 // pred_region
        _
      $region36: #{similarity_entailment.1} parent=11 // pred_fallthru
        _
      // Predicated region
      $region37: #{similarity_entailment.1} parent=11 // pred_check
        %p273 = pneg %p214
      $region38: #{similarity_entailment.1} parent=11 // pred_check_branch
        %275 = sbr.rel (%p273) target = $region40
      $region39: #{similarity_entailment.1} parent=11 // pred_region
        _
      $region40: #{similarity_entailment.1} parent=11 // pred_fallthru
        _
    $region12: #{similarity_entailment.1} parent=5 // pred_fallthru
      _
    %p276 = scmp.lt.s32.totalorder %s15, 2
    // Predicated region
    $region41: #{similarity_entailment.1} parent=5 // pred_check
      %p277 = pneg %p276
    $region42: #{similarity_entailment.1} parent=5 // pred_check_branch
      %279 = sbr.rel (%p277) target = $region44
    $region43: #{similarity_entailment.1} parent=5 // pred_region
      // Predicated region
      $region45: #{similarity_entailment.1} parent=43 // pred_check
        %p280 = pneg %p35
      $region46: #{similarity_entailment.1} parent=43 // pred_check_branch
        %282 = sbr.rel (%p280) target = $region48
      $region47: #{similarity_entailment.1} parent=43 // pred_region
        %p283 = scmp.lt.s32.totalorder %s15, 1
        %s284 = scalar_select %p283, %s15, 1
        %s285 = smul.addr %s284, 8
        %s286 = scalar_lea.vmem %s0, %s285
      $region48: #{similarity_entailment.1} parent=43 // pred_fallthru
        _
      // Predicated region
      $region49: #{similarity_entailment.1} parent=43 // pred_check
        %p287 = pneg %p61
      $region50: #{similarity_entailment.1} parent=43 // pred_check_branch
        %289 = sbr.rel (%p287) target = $region52
      $region51: #{similarity_entailment.1} parent=43 // pred_region
        %p290 = scmp.lt.s32.totalorder %s15, 1
        %s291 = scalar_select %p290, %s15, 1
        %s292 = smul.addr %s291, 8
        %s293 = scalar_lea.vmem %s1, %s292
      $region52: #{similarity_entailment.1} parent=43 // pred_fallthru
        _
    $region44: #{similarity_entailment.1} parent=5 // pred_fallthru
      _
    %p294 = scmp.le.s32.totalorder 1, %s15
    %p295 = scmp.lt.s32.totalorder %s15, 3
    %p296 = pnand %p294, %p295
    %p297 = pneg %p296
    // Predicated region
    $region53: #{similarity_entailment.1} parent=5 // pred_check
      _
    $region54: #{similarity_entailment.1} parent=5 // pred_check_branch
      %299 = sbr.rel (%p296) target = $region56
    $region55: #{similarity_entailment.1} parent=5 // pred_region
      %s300 = ssub.s32 %s15, 1
      %p301 = scmp.lt.s32.totalorder %s20, 1
      %s302 = scalar_select %p301, %s20, 1
      %s303 = smul.addr %s302, 8
      %s304 = scalar_lea.vmem %s0, %s303
      %p305 = pneg %p41
      %p306 = pneg %p38
      %p307 = scmp.lt.s32.totalorder %s20, 1
      %s308 = scalar_select %p307, %s20, 1
      %s309 = smul.addr %s308, 8
      %s310 = scalar_lea.vmem %s1, %s309
      %p311 = pneg %p67
      %p312 = pneg %p64
      %p313 = pneg %p88
      %p314 = pneg %p85
      %p315 = pneg %p109
      %p316 = pneg %p106
      %p317 = pneg %p130
      %p318 = pneg %p127
      %p319 = pneg %p151
      %p320 = pneg %p148
      %p321 = pneg %p172
      %p322 = pneg %p169
      %p323 = pneg %p193
      %p324 = pneg %p190
      %p325 = pneg %p214
      %p326 = pneg %p211
      %p327 = pneg %p240
      %p328 = pneg %p237
      %p329 = scmp.lt.s32.totalorder %s20, 1
      %s330 = scalar_select %p329, %s20, 1
      %s331 = smul.addr %s330, 8
      %s332 = scalar_lea.vmem %s9, %s331
      %p333 = scmp.lt.s32.totalorder %s20, 1
      %s334 = scalar_select %p333, %s20, 1
      %s335 = smul.addr %s334, 8
      %s336 = scalar_lea.vmem %s0, %s335
      %p337 = scmp.lt.s32.totalorder %s20, 1
      %s338 = scalar_select %p337, %s20, 1
      %s339 = smul.addr %s338, 8
      %s340 = scalar_lea.vmem %s1, %s339
      %p341 = scmp.lt.s32.totalorder %s20, 1
      %s342 = scalar_select %p341, %s20, 1
      %s343 = smul.addr %s342, 8
      %s344 = scalar_lea.vmem %s9, %s343
      %v346 = vld [vmem:[%s336] sm:$0xff]
      %v347 = vld [vmem:[%s340] sm:$0xff]
      %v348 = vmul.f32 %v346, %v347
      %v349 = vsub.f32 %v346, %v347
      %v350 = vand.u32 2147483647, %v349
      %v351 = vpack.c.bf16 %v346, %v346
      %v352 = vld [vmem:[%s2] sm:$0xf]
      %v353 = vld [vmem:[%s2 + $0x4] sm:$0xf]
      %v354 = vld [vmem:[%s2 + $0x8] sm:$0xf]
      %v355 = vld [vmem:[%s2 + $0xc] sm:$0xf]
      %v356 = vld [vmem:[%s2 + $0x10] sm:$0xf]
      %v357 = vld [vmem:[%s2 + $0x14] sm:$0xf]
      %v358 = vld [vmem:[%s2 + $0x18] sm:$0xf]
      %v359 = vld [vmem:[%s2 + $0x1c] sm:$0xf]
      %v360 = vpack.c.bf16 %v347, %v347
      %v361 = vld [vmem:[%s3] sm:$0xf]
      %v362 = vld [vmem:[%s3 + $0x4] sm:$0xf]
      %v363 = vld [vmem:[%s3 + $0x8] sm:$0xf]
      %v364 = vld [vmem:[%s3 + $0xc] sm:$0xf]
      %v365 = vld [vmem:[%s3 + $0x10] sm:$0xf]
      %v366 = vld [vmem:[%s3 + $0x14] sm:$0xf]
      %v367 = vld [vmem:[%s3 + $0x18] sm:$0xf]
      %v368 = vld [vmem:[%s3 + $0x1c] sm:$0xf]
      %v377 = vunpack.c.l.b16 %v361
      %v378 = vunpack.c.l.b16 %v362
      %v379 = vunpack.c.l.b16 %v363
      %v380 = vunpack.c.l.b16 %v364
      %v381 = vunpack.c.l.b16 %v365
      %v382 = vunpack.c.l.b16 %v366
      %v383 = vunpack.c.l.b16 %v367
      %v384 = vunpack.c.l.b16 %v368
      %v385 = vpack.c.b16 %v378, %v377
      %v386 = vpack.c.b16 %v380, %v379
      %v387 = vpack.c.b16 %v382, %v381
      %v388 = vpack.c.b16 %v384, %v383
      %vm393 = vcmask 523264
      %v395 = vsel %vm393, %v360, 0
      %397 = vmatprep.subr.bf16.mxu0 0
      %398 = vmatpush1.bf16.msra.mxu0 %v385
      %399 = vmatprep.subr.bf16.mxu0 0
      %400 = vmatpush1.bf16.msra.mxu0 %v386
      %401 = vmatprep.subr.bf16.mxu0 0
      %402 = vmatpush1.bf16.msra.mxu0 %v387
      %403 = vmatprep.subr.bf16.mxu0 0
      %404 = vmatpush1.bf16.msra.mxu0 %v388
      %405 = vmatprep.subr.bf16.mxu0 0
      %406 = vmatpush1.bf16.msra.mxu0 0
      %407 = vmatprep.subr.bf16.mxu0 0
      %408 = vmatpush1.bf16.msra.mxu0 0
      %409 = vmatprep.subr.bf16.mxu0 0
      %410 = vmatpush1.bf16.msra.mxu0 0
      %411 = vmatprep.subr.bf16.mxu0 0
      %412 = vmatpush1.bf16.msra.mxu0 0
      %413 = vmatprep.subr.bf16.mxu0 0
      %414 = vmatpush1.bf16.msra.mxu0 0
      %415 = vmatprep.subr.bf16.mxu0 0
      %416 = vmatpush1.bf16.msra.mxu0 0
      %417 = vmatprep.subr.bf16.mxu0 0
      %418 = vmatpush1.bf16.msra.mxu0 0
      %419 = vmatprep.subr.bf16.mxu0 0
      %420 = vmatpush1.bf16.msra.mxu0 0
      %421 = vmatprep.subr.bf16.mxu0 0
      %422 = vmatpush1.bf16.msra.mxu0 0
      %423 = vmatprep.subr.bf16.mxu0 0
      %424 = vmatpush1.bf16.msra.mxu0 0
      %425 = vmatprep.subr.bf16.mxu0 0
      %426 = vmatpush1.bf16.msra.mxu0 0
      %427 = vmatprep.subr.bf16.mxu0 0
      %428 = vmatpush1.bf16.msra.mxu0 0
      %429 = vmatprep.mubr.bf16.mxu0 0
      %430 = vmatmul.mubr.bf16.gmra.mrb[0].mxu0 %v395
      %v431 = vpop.f32.mrb[0].mxu0
      %v432 = vadd.f32 0.0, %v431
      %v433 = vpop.f32.mrb[0].mxu0
      %v434 = vpop.f32.mrb[0].mxu0
      %v435 = vpop.f32.mrb[0].mxu0
      %436 = vdwg.mxu0
      %v445 = vunpack.c.l.b16 %v352
      %v446 = vunpack.c.l.b16 %v353
      %v447 = vunpack.c.l.b16 %v354
      %v448 = vunpack.c.l.b16 %v355
      %v449 = vunpack.c.l.b16 %v356
      %v450 = vunpack.c.l.b16 %v357
      %v451 = vunpack.c.l.b16 %v358
      %v452 = vunpack.c.l.b16 %v359
      %v453 = vpack.c.b16 %v446, %v445
      %v454 = vpack.c.b16 %v448, %v447
      %v455 = vpack.c.b16 %v450, %v449
      %v456 = vpack.c.b16 %v452, %v451
      %v462 = vsel %vm393, %v351, 0
      %464 = vmatprep.subr.bf16.mxu0 0
      %465 = vmatpush1.bf16.msra.mxu0 %v453
      %466 = vmatprep.subr.bf16.mxu0 0
      %467 = vmatpush1.bf16.msra.mxu0 %v454
      %468 = vmatprep.subr.bf16.mxu0 0
      %469 = vmatpush1.bf16.msra.mxu0 %v455
      %470 = vmatprep.subr.bf16.mxu0 0
      %471 = vmatpush1.bf16.msra.mxu0 %v456
      %472 = vmatprep.subr.bf16.mxu0 0
      %473 = vmatpush1.bf16.msra.mxu0 0
      %474 = vmatprep.subr.bf16.mxu0 0
      %475 = vmatpush1.bf16.msra.mxu0 0
      %476 = vmatprep.subr.bf16.mxu0 0
      %477 = vmatpush1.bf16.msra.mxu0 0
      %478 = vmatprep.subr.bf16.mxu0 0
      %479 = vmatpush1.bf16.msra.mxu0 0
      %480 = vmatprep.subr.bf16.mxu0 0
      %481 = vmatpush1.bf16.msra.mxu0 0
      %482 = vmatprep.subr.bf16.mxu0 0
      %483 = vmatpush1.bf16.msra.mxu0 0
      %484 = vmatprep.subr.bf16.mxu0 0
      %485 = vmatpush1.bf16.msra.mxu0 0
      %486 = vmatprep.subr.bf16.mxu0 0
      %487 = vmatpush1.bf16.msra.mxu0 0
      %488 = vmatprep.subr.bf16.mxu0 0
      %489 = vmatpush1.bf16.msra.mxu0 0
      %490 = vmatprep.subr.bf16.mxu0 0
      %491 = vmatpush1.bf16.msra.mxu0 0
      %492 = vmatprep.subr.bf16.mxu0 0
      %493 = vmatpush1.bf16.msra.mxu0 0
      %494 = vmatprep.subr.bf16.mxu0 0
      %495 = vmatpush1.bf16.msra.mxu0 0
      %496 = vmatprep.mubr.bf16.mxu0 0
      %497 = vmatmul.mubr.bf16.gmra.mrb[0].mxu0 %v462
      %v498 = vpop.f32.mrb[0].mxu0
      %v499 = vadd.f32 %v432, %v498
      %v500 = vpop.f32.mrb[0].mxu0
      %v501 = vpop.f32.mrb[0].mxu0
      %v502 = vpop.f32.mrb[0].mxu0
      %503 = vdwg.mxu0
      %v504 = vpack.c.bf16 %v348, %v348
      %v505 = vld [vmem:[%s4] sm:$0xf]
      %v506 = vld [vmem:[%s4 + $0x4] sm:$0xf]
      %v507 = vld [vmem:[%s4 + $0x8] sm:$0xf]
      %v508 = vld [vmem:[%s4 + $0xc] sm:$0xf]
      %v509 = vld [vmem:[%s4 + $0x10] sm:$0xf]
      %v510 = vld [vmem:[%s4 + $0x14] sm:$0xf]
      %v511 = vld [vmem:[%s4 + $0x18] sm:$0xf]
      %v512 = vld [vmem:[%s4 + $0x1c] sm:$0xf]
      %v521 = vunpack.c.l.b16 %v505
      %v522 = vunpack.c.l.b16 %v506
      %v523 = vunpack.c.l.b16 %v507
      %v524 = vunpack.c.l.b16 %v508
      %v525 = vunpack.c.l.b16 %v509
      %v526 = vunpack.c.l.b16 %v510
      %v527 = vunpack.c.l.b16 %v511
      %v528 = vunpack.c.l.b16 %v512
      %v529 = vpack.c.b16 %v522, %v521
      %v530 = vpack.c.b16 %v524, %v523
      %v531 = vpack.c.b16 %v526, %v525
      %v532 = vpack.c.b16 %v528, %v527
      %v538 = vsel %vm393, %v504, 0
      %540 = vmatprep.subr.bf16.mxu0 0
      %541 = vmatpush1.bf16.msra.mxu0 %v529
      %542 = vmatprep.subr.bf16.mxu0 0
      %543 = vmatpush1.bf16.msra.mxu0 %v530
      %544 = vmatprep.subr.bf16.mxu0 0
      %545 = vmatpush1.bf16.msra.mxu0 %v531
      %546 = vmatprep.subr.bf16.mxu0 0
      %547 = vmatpush1.bf16.msra.mxu0 %v532
      %548 = vmatprep.subr.bf16.mxu0 0
      %549 = vmatpush1.bf16.msra.mxu0 0
      %550 = vmatprep.subr.bf16.mxu0 0
      %551 = vmatpush1.bf16.msra.mxu0 0
      %552 = vmatprep.subr.bf16.mxu0 0
      %553 = vmatpush1.bf16.msra.mxu0 0
      %554 = vmatprep.subr.bf16.mxu0 0
      %555 = vmatpush1.bf16.msra.mxu0 0
      %556 = vmatprep.subr.bf16.mxu0 0
      %557 = vmatpush1.bf16.msra.mxu0 0
      %558 = vmatprep.subr.bf16.mxu0 0
      %559 = vmatpush1.bf16.msra.mxu0 0
      %560 = vmatprep.subr.bf16.mxu0 0
      %561 = vmatpush1.bf16.msra.mxu0 0
      %562 = vmatprep.subr.bf16.mxu0 0
      %563 = vmatpush1.bf16.msra.mxu0 0
      %564 = vmatprep.subr.bf16.mxu0 0
      %565 = vmatpush1.bf16.msra.mxu0 0
      %566 = vmatprep.subr.bf16.mxu0 0
      %567 = vmatpush1.bf16.msra.mxu0 0
      %568 = vmatprep.subr.bf16.mxu0 0
      %569 = vmatpush1.bf16.msra.mxu0 0
      %570 = vmatprep.subr.bf16.mxu0 0
      %571 = vmatpush1.bf16.msra.mxu0 0
      %572 = vmatprep.mubr.bf16.mxu0 0
      %573 = vmatmul.mubr.bf16.gmra.mrb[0].mxu0 %v538
      %v574 = vpop.f32.mrb[0].mxu0
      %v575 = vadd.f32 0.0, %v574
      %v576 = vpop.f32.mrb[0].mxu0
      %v577 = vpop.f32.mrb[0].mxu0
      %v578 = vpop.f32.mrb[0].mxu0
      %579 = vdwg.mxu0
      %v580 = vadd.f32 %v499, %v575
      %v581 = vpack.c.bf16 %v350, %v350
      %v582 = vld [vmem:[%s5] sm:$0xf]
      %v583 = vld [vmem:[%s5 + $0x4] sm:$0xf]
      %v584 = vld [vmem:[%s5 + $0x8] sm:$0xf]
      %v585 = vld [vmem:[%s5 + $0xc] sm:$0xf]
      %v586 = vld [vmem:[%s5 + $0x10] sm:$0xf]
      %v587 = vld [vmem:[%s5 + $0x14] sm:$0xf]
      %v588 = vld [vmem:[%s5 + $0x18] sm:$0xf]
      %v589 = vld [vmem:[%s5 + $0x1c] sm:$0xf]
      %v598 = vunpack.c.l.b16 %v582
      %v599 = vunpack.c.l.b16 %v583
      %v600 = vunpack.c.l.b16 %v584
      %v601 = vunpack.c.l.b16 %v585
      %v602 = vunpack.c.l.b16 %v586
      %v603 = vunpack.c.l.b16 %v587
      %v604 = vunpack.c.l.b16 %v588
      %v605 = vunpack.c.l.b16 %v589
      %v606 = vpack.c.b16 %v599, %v598
      %v607 = vpack.c.b16 %v601, %v600
      %v608 = vpack.c.b16 %v603, %v602
      %v609 = vpack.c.b16 %v605, %v604
      %v615 = vsel %vm393, %v581, 0
      %617 = vmatprep.subr.bf16.mxu0 0
      %618 = vmatpush1.bf16.msra.mxu0 %v606
      %619 = vmatprep.subr.bf16.mxu0 0
      %620 = vmatpush1.bf16.msra.mxu0 %v607
      %621 = vmatprep.subr.bf16.mxu0 0
      %622 = vmatpush1.bf16.msra.mxu0 %v608
      %623 = vmatprep.subr.bf16.mxu0 0
      %624 = vmatpush1.bf16.msra.mxu0 %v609
      %625 = vmatprep.subr.bf16.mxu0 0
      %626 = vmatpush1.bf16.msra.mxu0 0
      %627 = vmatprep.subr.bf16.mxu0 0
      %628 = vmatpush1.bf16.msra.mxu0 0
      %629 = vmatprep.subr.bf16.mxu0 0
      %630 = vmatpush1.bf16.msra.mxu0 0
      %631 = vmatprep.subr.bf16.mxu0 0
      %632 = vmatpush1.bf16.msra.mxu0 0
      %633 = vmatprep.subr.bf16.mxu0 0
      %634 = vmatpush1.bf16.msra.mxu0 0
      %635 = vmatprep.subr.bf16.mxu0 0
      %636 = vmatpush1.bf16.msra.mxu0 0
      %637 = vmatprep.subr.bf16.mxu0 0
      %638 = vmatpush1.bf16.msra.mxu0 0
      %639 = vmatprep.subr.bf16.mxu0 0
      %640 = vmatpush1.bf16.msra.mxu0 0
      %641 = vmatprep.subr.bf16.mxu0 0
      %642 = vmatpush1.bf16.msra.mxu0 0
      %643 = vmatprep.subr.bf16.mxu0 0
      %644 = vmatpush1.bf16.msra.mxu0 0
      %645 = vmatprep.subr.bf16.mxu0 0
      %646 = vmatpush1.bf16.msra.mxu0 0
      %647 = vmatprep.subr.bf16.mxu0 0
      %648 = vmatpush1.bf16.msra.mxu0 0
      %649 = vmatprep.mubr.bf16.mxu0 0
      %650 = vmatmul.mubr.bf16.gmra.mrb[0].mxu0 %v615
      %v651 = vpop.f32.mrb[0].mxu0
      %v652 = vadd.f32 0.0, %v651
      %v653 = vpop.f32.mrb[0].mxu0
      %v654 = vpop.f32.mrb[0].mxu0
      %v655 = vpop.f32.mrb[0].mxu0
      %656 = vdwg.mxu0
      %v657 = vadd.f32 %v580, %v652
      %v658 = vld [vmem:[%s6] sm:$0x1]
      %v660 = vlaneseq
      %v661 = vshrl.u32 %v660, 7
      %v662 = vsub.s32 0, %v661
      %v663 = vrot.slane %v658, %v662
      %v665 = vadd.f32 %v657, %v663
      %v666 = vtanh.pop %v665
      %v667 = vpack.c.bf16 %v666, %v666
      %v668 = vld [vmem:[%s7] sm:$0xf]
      %v669 = vld [vmem:[%s7 + $0x4] sm:$0xf]
      %v670 = vld [vmem:[%s7 + $0x8] sm:$0xf]
      %v671 = vld [vmem:[%s7 + $0xc] sm:$0xf]
      %v672 = vld [vmem:[%s8] sm:$0x1]
      %v674 = vlaneseq
      %v675 = vshrl.u32 %v674, 7
      %v676 = vsub.s32 0, %v675
      %v677 = vrot.slane %v672, %v676
      %v683 = vunpack.c.l.b16 %v668
      %v684 = vunpack.c.l.b16 %v669
      %v685 = vunpack.c.l.b16 %v670
      %v686 = vunpack.c.l.b16 %v671
      %v687 = vpack.c.b16 %v684, %v683
      %v688 = vpack.c.b16 %v686, %v685
      %vm691 = vcmask 261120
      %v693 = vsel %vm691, %v667, 0
      %695 = vmatprep.subr.bf16.mxu0 0
      %696 = vmatpush1.bf16.msra.mxu0 %v687
      %697 = vmatprep.subr.bf16.mxu0 0
      %698 = vmatpush1.bf16.msra.mxu0 %v688
      %699 = vmatprep.subr.bf16.mxu0 0
      %700 = vmatpush1.bf16.msra.mxu0 0
      %701 = vmatprep.subr.bf16.mxu0 0
      %702 = vmatpush1.bf16.msra.mxu0 0
      %703 = vmatprep.subr.bf16.mxu0 0
      %704 = vmatpush1.bf16.msra.mxu0 0
      %705 = vmatprep.subr.bf16.mxu0 0
      %706 = vmatpush1.bf16.msra.mxu0 0
      %707 = vmatprep.subr.bf16.mxu0 0
      %708 = vmatpush1.bf16.msra.mxu0 0
      %709 = vmatprep.subr.bf16.mxu0 0
      %710 = vmatpush1.bf16.msra.mxu0 0
      %711 = vmatprep.subr.bf16.mxu0 0
      %712 = vmatpush1.bf16.msra.mxu0 0
      %713 = vmatprep.subr.bf16.mxu0 0
      %714 = vmatpush1.bf16.msra.mxu0 0
      %715 = vmatprep.subr.bf16.mxu0 0
      %716 = vmatpush1.bf16.msra.mxu0 0
      %717 = vmatprep.subr.bf16.mxu0 0
      %718 = vmatpush1.bf16.msra.mxu0 0
      %719 = vmatprep.subr.bf16.mxu0 0
      %720 = vmatpush1.bf16.msra.mxu0 0
      %721 = vmatprep.subr.bf16.mxu0 0
      %722 = vmatpush1.bf16.msra.mxu0 0
      %723 = vmatprep.subr.bf16.mxu0 0
      %724 = vmatpush1.bf16.msra.mxu0 0
      %725 = vmatprep.subr.bf16.mxu0 0
      %726 = vmatpush1.bf16.msra.mxu0 0
      %727 = vmatprep.mubr.bf16.mxu0 0
      %728 = vmatmul.mubr.bf16.gmra.mrb[0].mxu0 %v693
      %v729 = vpop.f32.mrb[0].mxu0
      %v730 = vadd.f32 %v677, %v729
      %v731 = vpop.f32.mrb[0].mxu0
      %v732 = vpop.f32.mrb[0].mxu0
      %v733 = vpop.f32.mrb[0].mxu0
      %734 = vdwg.mxu0
      %vm735 = vcmask 64512
      %736 = vst.msk [vmem:[%s344] sm:$0xff] %vm735, %v730
      %p737 = scmp.lt.s32.totalorder %s20, 1
      %s738 = scalar_select %p737, %s20, 1
      %s739 = smul.addr %s738, 8
      %s740 = scalar_lea.vmem %s9, %s739
      // Predicated region
      $region57: #{similarity_entailment.1} parent=55 // pred_check
        %p741 = pneg %p237
      $region58: #{similarity_entailment.1} parent=55 // pred_check_branch
        %743 = sbr.rel (%p741) target = $region60
      $region59: #{similarity_entailment.1} parent=55 // pred_region
        _
      $region60: #{similarity_entailment.1} parent=55 // pred_fallthru
        _
    $region56: #{similarity_entailment.1} parent=5 // pred_fallthru
      _
    %p744 = scmp.le.s32.totalorder 2, %s15
    // Predicated region
    $region61: #{similarity_entailment.1} parent=5 // pred_check
      %p745 = pneg %p744
    $region62: #{similarity_entailment.1} parent=5 // pred_check_branch
      %747 = sbr.rel (%p745) target = $region64
    $region63: #{similarity_entailment.1} parent=5 // pred_region
      %s748 = ssub.s32 %s15, 2
      // Predicated region
      $region65: #{similarity_entailment.1} parent=63 // pred_check
        %p749 = pneg %p243
      $region66: #{similarity_entailment.1} parent=63 // pred_check_branch
        %751 = sbr.rel (%p749) target = $region68
      $region67: #{similarity_entailment.1} parent=63 // pred_region
        %p752 = scmp.lt.s32.totalorder %s21, 1
        %s753 = scalar_select %p752, %s21, 1
        %s754 = smul.addr %s753, 8
        %s755 = scalar_lea.vmem %s9, %s754
      $region68: #{similarity_entailment.1} parent=63 // pred_fallthru
        _
    $region64: #{similarity_entailment.1} parent=5 // pred_fallthru
      _
  $region6: #{similarity_entailment.1} parent=0 // loop_footer
    %s19 = sadd.s32 1, %s15
  $region7: #{similarity_entailment.1} parent=0 // loop_footer_branch
    %14 = sbr.rel target = $region3
  $region8: #{similarity_entailment.1} parent=0 // loop_exit
    _

</llo_original>
